<compile_context>
chip_gen: v5e
topology: v5e:2x2
jax: 0.10.0
libtpu: 0.0.40
codegen_flags: <defaults>
</compile_context>

<pallas_src>
import numpy as np
import jax
import jax.numpy as jnp
from jax.experimental import pallas as pl
from jax.experimental.pallas import tpu as pltpu


def _expand_kernel(x_ref, o_ref):
    """x_ref: (TB, F), o_ref: (TB, count*F); o[:, j*F:(j+1)*F] = x for all j."""
    f = x_ref.shape[1]
    count = o_ref.shape[1] // f
    # Static unroll over `count`: each iteration is one dense, full-(TB,F),
    # lane-wide copy at a static lane offset -- no masked sublane stores, no
    # scalar loop overhead, and the output writeback DMA stays contiguous.
    for j in range(count):
        o_ref[:, j * f:(j + 1) * f] = x_ref[...]


def _round_up(v, m):
    return -(-v // m) * m


def _sublane_pack(dtype):
    """Sublane packing of the second-minor dim: 8 (32-bit), 16 (16-bit), 32 (8-bit)."""
    return {4: 8, 2: 16, 1: 32}.get(jnp.dtype(dtype).itemsize, 8)


def _vmem_capacity_bytes():
    try:
        return int(pltpu.get_tpu_info().vmem_capacity_bytes)
    except Exception:
        return 64 << 20  # conservative: v7x physical VMEM per TensorCore


def _choose_batch_tile(B, count, F, itemsize, sublane, block_budget):
    """Batch tile: fits the double-buffered in+out VMEM budget, is sublane-packed,
    carries >= ~1 MiB of traffic per step, and yields >= ~4 pipeline steps."""
    row_bytes = (1 + count) * F * itemsize          # in + out bytes per input row
    cap = max(1, block_budget // (2 * row_bytes))   # rows whose 2x-buffered blocks fit
    cap = max(sublane, (cap // sublane) * sublane)
    # Keep per-step traffic >= ~1 MiB so the ~0.35 us/step overhead is negligible.
    min_rows = _round_up(max(1, -(-(1 << 20) // row_bytes)), sublane)
    # Aim for >= 4 grid steps so fetch/compute/writeback of adjacent steps overlap.
    quarter = _round_up(-(-B // 4), sublane)
    tb = min(cap, max(min_rows, quarter))
    if tb >= B:
        return B                                    # single full-extent block: always legal
    return tb


def feat_expander(x: jax.Array, count: int, *, block_rows=None) -> jax.Array:
    """Repeats each leading-dim entry `count` times (repeat-interleave on axis 0)."""
    if count == 1:
        return x

    B = x.shape[0]
    trailing = x.shape[1:]
    F = int(np.prod(trailing)) if trailing else 1
    itemsize = jnp.dtype(x.dtype).itemsize

    # Sub-lane-width features (or empty batch): XLA's broadcast copy is strictly
    # better than a kernel running at <= F/128 lane efficiency.
    if B == 0 or F < 128:
        return feat_expander_ref(x, count)

    sublane = _sublane_pack(x.dtype)
    vmem_cap = _vmem_capacity_bytes()
    # ~24 MiB of double-buffered blocks on v7x (64 MiB VMEM), up to ~48 MiB on v5e/v6e.
    block_budget = min(48 << 20, max(16 << 20, vmem_cap // 2 - (8 << 20)))

    if block_rows is not None:
        TB = min(int(block_rows), B)                # test/override hook
    else:
        TB = _choose_batch_tile(B, count, F, itemsize, sublane, block_budget)
    num_blocks = pl.cdiv(B, TB)

    # Lane-dense 2-D views; (B, count*F) is row-major identical to (B*count, F),
    # so both reshapes below are free (no extra HBM passes).
    xf = x.reshape(B, F)

    block_bytes = 2 * TB * (1 + count) * F * itemsize   # double-buffered in + out
    vmem_limit = int(min(max(32 << 20, block_bytes + (8 << 20)), vmem_cap - (8 << 20)))

    out2d = pl.pallas_call(
        _expand_kernel,
        out_shape=jax.ShapeDtypeStruct((B, count * F), x.dtype),
        grid_spec=pltpu.PrefetchScalarGridSpec(
            num_scalar_prefetch=0,
            grid=(num_blocks,),
            # (TB, F) input rows; F is full-extent so any F is legal.
            in_specs=[pl.BlockSpec((TB, F), lambda i: (i, 0))],
            # (TB, count*F) lane-dense output block; last dim full-extent.
            # Partial trailing batch blocks are masked by Pallas on writeback.
            out_specs=pl.BlockSpec((TB, count * F), lambda i: (i, 0)),
        ),
        compiler_params=pltpu.CompilerParams(
            # TODO(synk): on v7x, pltpu.CORE_PARALLEL on this axis would force
            # sharding across the 2 TensorCores; kept "parallel" for portability.
            dimension_semantics=("parallel",),
            vmem_limit_bytes=vmem_limit,
        ),
        cost_estimate=pl.CostEstimate(
            flops=0,
            transcendentals=0,
            bytes_accessed=(1 + count) * B * F * itemsize,
        ),
    )(xf)

    return out2d.reshape((B * count,) + trailing)


def feat_expander_ref(x: jax.Array, count: int) -> jax.Array:
    """Pure-JAX reference matching the PyTorch forward exactly."""
    B = x.shape[0]
    rest = x.shape[1:]
    return jnp.broadcast_to(x[:, None], (B, count) + rest).reshape((B * count,) + rest)


if __name__ == "__main__":
    key = jax.random.PRNGKey(0)
    B, C, H, W = 2, 4, 16, 16
    count = 3

    x = jax.random.normal(key, (B, C, H, W), dtype=jnp.float32)

    out = jax.block_until_ready(feat_expander(x, count))
    ref = feat_expander_ref(x, count)

    assert out.shape == (B * count, C, H, W), out.shape
    assert out.dtype == x.dtype
    np.testing.assert_allclose(np.asarray(out), np.asarray(ref), rtol=0, atol=0)

    # Multi-block path with a partial trailing block (masked writeback) and
    # an odd batch size: forces 2 grid steps via block_rows override.
    x2 = jax.random.normal(jax.random.PRNGKey(1), (10, 2, 16, 8), dtype=jnp.float32)
    out2 = jax.block_until_ready(feat_expander(x2, 2, block_rows=8))
    np.testing.assert_allclose(
        np.asarray(out2), np.asarray(feat_expander_ref(x2, 2)), rtol=0, atol=0
    )

    print("KERNEL_OK")
</pallas_src>

<mosaic_0001>
module attributes {stable_mosaic.version = 11 : i64} {
  func.func @_expand_kernel(%arg0: i32, %arg1: memref<2x1024xf32, #tpu.memory_space<vmem>>, %arg2: memref<2x3072xf32, #tpu.memory_space<vmem>>) attributes {dimension_semantics = [#tpu.dimension_semantics<parallel>], iteration_bounds = array<i64: 1>, scalar_prefetch = 0 : i64, scratch_operands = 0 : i64, tpu.core_type = #tpu.core_type<tc>, window_params = [{transform_indices = @transform_0, window_bounds = array<i64: 2, 1024>}, {transform_indices = @transform_1, window_bounds = array<i64: 2, 3072>}]} {
    %c0 = arith.constant 0 : index
    %c0_0 = arith.constant 0 : index
    %0 = vector.load %arg1[%c0, %c0_0] : memref<2x1024xf32, #tpu.memory_space<vmem>>, vector<2x1024xf32>
    %c0_1 = arith.constant 0 : index
    %c0_2 = arith.constant 0 : index
    %1 = vector.load %arg2[%c0_1, %c0_2] : memref<2x3072xf32, #tpu.memory_space<vmem>>, vector<2x1024xf32>
    tpu.vector_store %arg2[%c0_1, %c0_2], %0 {strides = array<i32>} : memref<2x3072xf32, #tpu.memory_space<vmem>>, vector<2x1024xf32>,
    %c0_3 = arith.constant 0 : index
    %c0_4 = arith.constant 0 : index
    %2 = vector.load %arg1[%c0_3, %c0_4] : memref<2x1024xf32, #tpu.memory_space<vmem>>, vector<2x1024xf32>
    %c0_5 = arith.constant 0 : index
    %c1024 = arith.constant 1024 : index
    %3 = vector.load %arg2[%c0_5, %c1024] : memref<2x3072xf32, #tpu.memory_space<vmem>>, vector<2x1024xf32>
    tpu.vector_store %arg2[%c0_5, %c1024], %2 {strides = array<i32>} : memref<2x3072xf32, #tpu.memory_space<vmem>>, vector<2x1024xf32>,
    %c0_6 = arith.constant 0 : index
    %c0_7 = arith.constant 0 : index
    %4 = vector.load %arg1[%c0_6, %c0_7] : memref<2x1024xf32, #tpu.memory_space<vmem>>, vector<2x1024xf32>
    %c0_8 = arith.constant 0 : index
    %c2048 = arith.constant 2048 : index
    %5 = vector.load %arg2[%c0_8, %c2048] : memref<2x3072xf32, #tpu.memory_space<vmem>>, vector<2x1024xf32>
    tpu.vector_store %arg2[%c0_8, %c2048], %4 {strides = array<i32>} : memref<2x3072xf32, #tpu.memory_space<vmem>>, vector<2x1024xf32>,
    return
  }
  func.func @transform_0(%arg0: i32) -> (i32, i32) {
    %c0_i32 = arith.constant 0 : i32
    %c0_i32_0 = arith.constant 0 : i32
    return %arg0, %c0_i32 : i32, i32
  }
  func.func @transform_1(%arg0: i32) -> (i32, i32) {
    %c0_i32 = arith.constant 0 : i32
    %c0_i32_0 = arith.constant 0 : i32
    return %arg0, %c0_i32 : i32, i32
  }
}

</mosaic_0001>

<llo_original>
// kernel: tpu_custom_call.1
$region0: #{tpu_custom_call.1}
  #allocation0 [shape = 'u32[]', space=smem, size = 0x4, offset = 0x4, fixed_abs, tag = 'smem constant byte address 0x4 - core index']
  #allocation1 [shape = 'u32[72,128]{1,0:T(1,128)}', space=vmem, size = 0x9000, scoped, tag = 'internal scratch']
  %s0 = inlined_call_operand.hbm [shape: f32[2,1024], index: 0, kind: input, shape index: {}]
  %s1 = inlined_call_operand.hbm [shape: f32[2,3072], index: 1, kind: output, shape index: {}]
  %s2 = sld [smem:[#allocation0]]
  $region18: #{tpu_custom_call.1} parent=0
    _
  %s4 = ssub.s32 1, %s2
  %s5 = scalar_select 0, %s4, %s2
  $region1: #{tpu_custom_call.1} parent=0
    #allocation2 [shape = 'u8[8192]{0}', space=vmem, size = 0x2000, scoped, tag = 'input window, operand 0, single buffered']
    #allocation3 [shape = 's32[1]{0}', space=sflag, size = 0x4, scoped, tag = 'scoped memory for tpu_custom_call.1']
    #allocation4 [shape = 's32[1]{0}', space=sflag, size = 0x4, scoped, tag = 'scoped memory for tpu_custom_call.1']
    #allocation5 [shape = 'u8[24576]{0}', space=vmem, size = 0x6000, scoped, tag = 'output window, operand 0, single buffered']
    %6 = vsyncpa [#allocation3], 0
    %7 = vsyncpa [#allocation4], 0
    // Predicated region
    $region2: #{tpu_custom_call.1} parent=1 // pred_check
      _
    $region3: #{tpu_custom_call.1} parent=1 // pred_check_branch
      %9 = sbr.rel (0) target = $region5
    $region4: #{tpu_custom_call.1} parent=1 // pred_region
      %11 = vsyncadd [#allocation3], 0
      %s13 = sshll.u32 %s0, 4
      %s14 = int_to_ptr.hbm [resolvable:$true] %s13
      %s15 = sshll.u32 [#allocation2], 4
      %s16 = int_to_ptr.vmem [resolvable:$true] %s15
      %18 = dma.hbm_to_vmem [thread:$0]  %s14, 256, %s16, [#allocation3]
    $region5: #{tpu_custom_call.1} parent=1 // pred_fallthru
      _
    // Predicated region
    $region6: #{tpu_custom_call.1} parent=1 // pred_check
      _
    $region7: #{tpu_custom_call.1} parent=1 // pred_check_branch
      %20 = sbr.rel (0) target = $region9
    $region8: #{tpu_custom_call.1} parent=1 // pred_region
      %22 = dma.done [#allocation3], 256
    $region9: #{tpu_custom_call.1} parent=1 // pred_fallthru
      _
    %v23 = vld [vmem:[#allocation2] sm:$0xff]
    %v24 = vld [vmem:[#allocation2 + $0x8] sm:$0xff]
    %25 = vst [vmem:[#allocation5] sm:$0xff] %v23
    %26 = vst [vmem:[#allocation5 + $0x8] sm:$0xff] %v24
    %v27 = vld [vmem:[#allocation2] sm:$0xff]
    %v28 = vld [vmem:[#allocation2 + $0x8] sm:$0xff]
    %29 = vst [vmem:[#allocation5 + $0x10] sm:$0xff] %v27
    %30 = vst [vmem:[#allocation5 + $0x18] sm:$0xff] %v28
    %v31 = vld [vmem:[#allocation2] sm:$0xff]
    %v32 = vld [vmem:[#allocation2 + $0x8] sm:$0xff]
    %33 = vst [vmem:[#allocation5 + $0x20] sm:$0xff] %v31
    %34 = vst [vmem:[#allocation5 + $0x28] sm:$0xff] %v32
    // Predicated region
    $region10: #{tpu_custom_call.1} parent=1 // pred_check
      _
    $region11: #{tpu_custom_call.1} parent=1 // pred_check_branch
      %36 = sbr.rel (0) target = $region13
    $region12: #{tpu_custom_call.1} parent=1 // pred_region
      %38 = vsyncadd [#allocation4], 0
      %s40 = sshll.u32 [#allocation5], 4
      %s41 = int_to_ptr.vmem [resolvable:$true] %s40
      %s42 = sshll.u32 %s1, 4
      %s43 = int_to_ptr.hbm [resolvable:$true] %s42
      %45 = dma.vmem_to_hbm [thread:$0]  %s41, 768, %s43, [#allocation4]
    $region13: #{tpu_custom_call.1} parent=1 // pred_fallthru
      _
    // Predicated region
    $region14: #{tpu_custom_call.1} parent=1 // pred_check
      _
    $region15: #{tpu_custom_call.1} parent=1 // pred_check_branch
      %47 = sbr.rel (0) target = $region17
    $region16: #{tpu_custom_call.1} parent=1 // pred_region
      %49 = dma.done [#allocation4], 768
    $region17: #{tpu_custom_call.1} parent=1 // pred_fallthru
      _
    %50 = vsyncpa [#allocation3], 1
    %51 = vsyncpa [#allocation4], 1

</llo_original>
